<compile_context>
chip_gen: v6e
topology: v6e:2x2x1
jax: 0.10.0
libtpu: 0.0.40
codegen_flags: <defaults>
</compile_context>

<pallas_src>
import jax
import jax.numpy as jnp
from jax.experimental import pallas as pl
from jax.experimental.pallas import tpu as pltpu

NUM_IN = 5    # Linear(5, 3)
NUM_HID = 3
NUM_OUT = 1   # Linear(3, 1)

_SUBLANES = 8
_LANES = 128


def _round_up(x, m):
    return ((x + m - 1) // m) * m


def _fused_affine_kernel(b_ref, w_ref, x_ref, o_ref):
    """o[0, n] = sum_k x[k, n] * w[k, 0] + b    (fused two-layer affine).

    b_ref : SMEM (1,)      f32 -- fused bias b1 @ w2 + b2 (resident scalar)
    w_ref : VMEM (8, 1)    f32 -- fused weight w1 @ w2, zero-padded to 8 sublanes (resident)
    x_ref : VMEM (8, TN)   f32 -- feature-major input block, batch on the 128-lane axis
                                  (sublanes 5..7 are zero padding)
    o_ref : VMEM (1, TN)   f32 -- lane-dense output block (unmasked stores)
    """
    prod = x_ref[...] * w_ref[...]                                  # (8, TN) VPU
    o_ref[...] = jnp.sum(prod, axis=0, keepdims=True) + b_ref[0]    # sublane reduce (XLU) + bias


def _pallas_forward(x, w_eff, b_eff, *, block_n):
    """Pallas path: x (N, 5) f32, w_eff (5,), b_eff (1,) -> (N, 1) f32."""
    N = x.shape[0]

    # Block size: multiple of 128 lanes, large enough to amortize the ~0.35 us
    # per-grid-step overhead, small enough that the ~128*TN-byte double-buffered
    # working set fits scoped VMEM on v5e/v6e/v7x, and capped so the grid keeps
    # >= 4 blocks for megacore sharding on v7x.
    block_n = _round_up(max(block_n, _LANES), _LANES)
    quarter = _round_up(pl.cdiv(N, 4), _LANES)
    tn = max(_LANES, min(block_n, quarter))
    n_pad = _round_up(N, tn)
    grid_n = n_pad // tn

    # Feature-major, lane-dense, 8-sublane-padded layout.
    x_p = jnp.pad(x.T, ((0, _SUBLANES - NUM_IN), (0, n_pad - N)))          # (8, n_pad)
    w_p = jnp.pad(w_eff.reshape(NUM_IN, 1), ((0, _SUBLANES - NUM_IN), (0, 0)))  # (8, 1)

    y_t = pl.pallas_call(
        _fused_affine_kernel,
        out_shape=jax.ShapeDtypeStruct((NUM_OUT, n_pad), jnp.float32),
        grid=(grid_n,),
        in_specs=[
            pl.BlockSpec(memory_space=pltpu.MemorySpace.SMEM),        # b_eff (1,)   resident
            pl.BlockSpec((_SUBLANES, 1), lambda i: (0, 0)),           # w_p   (8,1)  resident
            pl.BlockSpec((_SUBLANES, tn), lambda i: (0, i)),          # x_p   (8,TN) blocked over N
        ],
        out_specs=pl.BlockSpec((NUM_OUT, tn), lambda i: (0, i)),      # (1,TN) lane-dense
        compiler_params=pltpu.CompilerParams(
            dimension_semantics=("parallel",),          # shard N blocks across v7x's 2 TCs
            allow_input_fusion=[False, False, True],    # let XLA fuse the pad/transpose of x
            vmem_limit_bytes=32 * 1024 * 1024,          # safe on v5e/v6e/v7x scoped VMEM
        ),
    )(b_eff, w_p, x_p)

    return y_t[0, :N].reshape(N, NUM_OUT)


def simple_linear_regression(x, w1, b1, w2, b2, *, block_n=128 * 1024, min_pallas_n=4096):
    """x: (N, 5) f32 -> (N, 1) f32.

    Weights are stored pre-transposed as (in_features, out_features), so the
    math matches PyTorch's x @ W1.T + b1 then @ W2.T + b2 exactly (up to f32
    rounding introduced by fusing the two affine layers).
    """
    N = x.shape[0]

    # Exact fusion of the two affine layers (tiny; done once, outside the kernel).
    w_eff = (w1 @ w2).reshape(NUM_IN)      # (5,)
    b_eff = (b1 @ w2 + b2).reshape(NUM_OUT)  # (1,)

    # Small-N fallback: at tiny batch sizes the pallas_call is pure fixed
    # overhead (padding, dispatch, DMA setup); a fused XLA matvec wins there.
    if N < min_pallas_n:
        return x @ w_eff.reshape(NUM_IN, NUM_OUT) + b_eff

    return _pallas_forward(x, w_eff, b_eff, block_n=block_n)


def init_params(key):
    """Deterministic init mimicking nn.Linear defaults: U(-1/sqrt(fan_in), 1/sqrt(fan_in)).
    Weights stored as (in_features, out_features)."""
    k1, k2, k3, k4 = jax.random.split(key, 4)
    bound1 = 1.0 / jnp.sqrt(5.0)
    bound2 = 1.0 / jnp.sqrt(3.0)
    w1 = jax.random.uniform(k1, (NUM_IN, NUM_HID), jnp.float32, -bound1, bound1)
    b1 = jax.random.uniform(k2, (1, NUM_HID), jnp.float32, -bound1, bound1)
    w2 = jax.random.uniform(k3, (NUM_HID, NUM_OUT), jnp.float32, -bound2, bound2)
    b2 = jax.random.uniform(k4, (1, NUM_OUT), jnp.float32, -bound2, bound2)
    return w1, b1, w2, b2


if __name__ == "__main__":
    key = jax.random.PRNGKey(0)
    w1, b1, w2, b2 = init_params(key)

    # Same input construction as the PyTorch script: linspace(-10, 10, 100).view(-1, 5)
    x = jnp.linspace(-10.0, 10.0, 100, dtype=jnp.float32).reshape(-1, NUM_IN)  # (20, 5)
    y_ref = (x @ w1 + b1) @ w2 + b2   # unfused two-layer reference

    # 1) Pallas kernel path, forced at the module's shape (single-block grid).
    y_pallas = jax.block_until_ready(
        simple_linear_regression(x, w1, b1, w2, b2, min_pallas_n=0))
    assert y_pallas.shape == (20, 1)
    assert jnp.allclose(y_pallas, y_ref, atol=1e-5, rtol=1e-5), "pallas path mismatch"

    # 2) Default dispatch: small N takes the fused XLA matvec fallback.
    y_small = jax.block_until_ready(simple_linear_regression(x, w1, b1, w2, b2))
    assert jnp.allclose(y_small, y_ref, atol=1e-5, rtol=1e-5), "fallback path mismatch"

    # 3) Slightly larger batch to exercise a multi-block grid (4 blocks of 256 rows).
    xb = jax.random.normal(jax.random.PRNGKey(1), (1024, NUM_IN), jnp.float32)
    yb_ref = (xb @ w1 + b1) @ w2 + b2
    yb = jax.block_until_ready(
        simple_linear_regression(xb, w1, b1, w2, b2, min_pallas_n=0))
    assert yb.shape == (1024, 1)
    assert jnp.allclose(yb, yb_ref, atol=1e-4, rtol=1e-4), "multi-block pallas mismatch"

    print("KERNEL_OK")
</pallas_src>

<mosaic_0001>
module attributes {stable_mosaic.version = 11 : i64} {
  func.func @_fused_affine_kernel(%arg0: i32, %arg1: memref<1xf32, #tpu.memory_space<smem>>, %arg2: memref<8x1xf32, #tpu.memory_space<vmem>>, %arg3: memref<8x128xf32, #tpu.memory_space<vmem>>, %arg4: memref<1x128xf32, #tpu.memory_space<vmem>>) attributes {dimension_semantics = [#tpu.dimension_semantics<parallel>], iteration_bounds = array<i64: 1>, scalar_prefetch = 0 : i64, scratch_operands = 0 : i64, tpu.core_type = #tpu.core_type<tc>, window_params = [{transform_indices = @transform_0, window_bounds = array<i64: 1>}, {pipeline_mode = #tpu.pipeline_mode<synchronous>, transform_indices = @transform_1, window_bounds = array<i64: 8, 1>}, {transform_indices = @transform_2, window_bounds = array<i64: 8, 128>}, {transform_indices = @transform_3, window_bounds = array<i64: 1, 128>}]} {
    %c0 = arith.constant 0 : index
    %c0_0 = arith.constant 0 : index
    %0 = vector.load %arg3[%c0, %c0_0] : memref<8x128xf32, #tpu.memory_space<vmem>>, vector<8x128xf32>
    %c0_1 = arith.constant 0 : index
    %c0_2 = arith.constant 0 : index
    %1 = vector.load %arg2[%c0_1, %c0_2] : memref<8x1xf32, #tpu.memory_space<vmem>>, vector<8x1xf32>
    %2 = vector.broadcast %1 : vector<8x1xf32> to vector<8x128xf32>
    %3 = arith.mulf %0, %2 : vector<8x128xf32>
    %cst = arith.constant dense<0.000000e+00> : vector<128xf32>
    %4 = vector.multi_reduction <add>, %3, %cst [0] : vector<8x128xf32> to vector<128xf32>
    %5 = vector.shape_cast %4 : vector<128xf32> to vector<1x128xf32>
    %c0_3 = arith.constant 0 : index
    %6 = memref.load %arg1[%c0_3] : memref<1xf32, #tpu.memory_space<smem>>
    %7 = vector.broadcast %6 : f32 to vector<1x128xf32>
    %8 = arith.addf %5, %7 : vector<1x128xf32>
    %c0_4 = arith.constant 0 : index
    %c0_5 = arith.constant 0 : index
    %9 = vector.load %arg4[%c0_4, %c0_5] : memref<1x128xf32, #tpu.memory_space<vmem>>, vector<1x128xf32>
    tpu.vector_store %arg4[%c0_4, %c0_5], %8 {strides = array<i32>} : memref<1x128xf32, #tpu.memory_space<vmem>>, vector<1x128xf32>,
    return
  }
  func.func @transform_0(%arg0: i32) -> i32 {
    %c0_i32 = arith.constant 0 : i32
    %c0_i32_0 = arith.constant 0 : i32
    return %c0_i32 : i32
  }
  func.func @transform_1(%arg0: i32) -> (i32, i32) {
    %c0_i32 = arith.constant 0 : i32
    %c0_i32_0 = arith.constant 0 : i32
    %c0_i32_1 = arith.constant 0 : i32
    return %c0_i32, %c0_i32_0 : i32, i32
  }
  func.func @transform_2(%arg0: i32) -> (i32, i32) {
    %c0_i32 = arith.constant 0 : i32
    %c0_i32_0 = arith.constant 0 : i32
    return %c0_i32, %arg0 : i32, i32
  }
  func.func @transform_3(%arg0: i32) -> (i32, i32) {
    %c0_i32 = arith.constant 0 : i32
    %c0_i32_0 = arith.constant 0 : i32
    return %c0_i32, %arg0 : i32, i32
  }
}

</mosaic_0001>

<llo_original>
// kernel: tpu_custom_call.1
$region0: #{tpu_custom_call.1}
  #allocation0 [shape = 'u32[]', space=smem, size = 0x4, offset = 0x4, fixed_abs, tag = 'smem constant byte address 0x4 - core index']
  #allocation1 [shape = 'u32[144,128]{1,0:T(1,128)}', space=vmem, size = 0x12000, scoped, tag = 'internal scratch']
  #allocation2 [shape = 'f32[1]{0:T(128)S(6)}', space=smem, size = 0x200, scoped, tag = 'scoped memory for tpu_custom_call.1']
  %s0 = inlined_call_operand.<no memory space> [shape: f32[1], index: 0, kind: input, shape index: {}]
  %s1 = inlined_call_operand.vmem [shape: f32[8,1], index: 1, kind: input, shape index: {}]
  %s2 = inlined_call_operand.vmem [shape: f32[8,128], index: 2, kind: input, shape index: {}]
  %s3 = inlined_call_operand.hbm [shape: f32[1,128], index: 3, kind: output, shape index: {}]
  %s4 = sld [smem:[#allocation0]]
  $region22: #{tpu_custom_call.1} parent=0
    _
  %s6 = ssub.s32 1, %s4
  %s7 = scalar_select 0, %s6, %s4
  %8 = sst [smem:[#allocation2]] %s0
  $region1: #{tpu_custom_call.1} parent=0
    #allocation3 [shape = 'u8[512]{0}', space=vmem, size = 0x400, scoped, tag = 'output window, operand 0, single buffered']
    #allocation4 [shape = 's32[1]{0}', space=sflag, size = 0x4, scoped, tag = 'scoped memory for tpu_custom_call.1']
    %9 = vsyncpa [#allocation4], 0
    // Predicated region
    $region2: #{tpu_custom_call.1} parent=1 // pred_check
      _
    $region3: #{tpu_custom_call.1} parent=1 // pred_check_branch
      %11 = sbr.rel (0) target = $region5
    $region4: #{tpu_custom_call.1} parent=1 // pred_region
      _
    $region5: #{tpu_custom_call.1} parent=1 // pred_fallthru
      _
    // Predicated region
    $region6: #{tpu_custom_call.1} parent=1 // pred_check
      _
    $region7: #{tpu_custom_call.1} parent=1 // pred_check_branch
      %13 = sbr.rel (0) target = $region9
    $region8: #{tpu_custom_call.1} parent=1 // pred_region
      _
    $region9: #{tpu_custom_call.1} parent=1 // pred_fallthru
      _
    // Predicated region
    $region10: #{tpu_custom_call.1} parent=1 // pred_check
      _
    $region11: #{tpu_custom_call.1} parent=1 // pred_check_branch
      %15 = sbr.rel (0) target = $region13
    $region12: #{tpu_custom_call.1} parent=1 // pred_region
      _
    $region13: #{tpu_custom_call.1} parent=1 // pred_fallthru
      _
    %v16 = vld [vmem:[%s2] sm:$0xff]
    %v17 = vld [vmem:[%s1] sm:$0xff]
    %19 = vset.pattern.permute.xlu0 0
    %20 = vperm.xlu0 %19, %v17
    %v21 = vpop.permute.xlu0 %20
    %v23 = vmul.f32 %v16, %v21
    %v24 = vrot.slane %v23, 4
    %v25 = vadd.f32 %v23, %v24
    %v26 = vrot.slane %v25, 2
    %v27 = vadd.f32 %v25, %v26
    %v28 = vrot.slane %v27, 1
    %v29 = vadd.f32 %v27, %v28
    %s30 = sld [smem:[#allocation2]]
    %v31 = vstv %s30
    %v32 = vadd.f32 %v29, %v31
    %33 = vst [vmem:[#allocation3] sm:$0x1] %v32
    // Predicated region
    $region14: #{tpu_custom_call.1} parent=1 // pred_check
      _
    $region15: #{tpu_custom_call.1} parent=1 // pred_check_branch
      %35 = sbr.rel (0) target = $region17
    $region16: #{tpu_custom_call.1} parent=1 // pred_region
      %s37 = ssub.s32 16, 16
      %38 = vsyncadd [#allocation4], %s37
      %s40 = sshll.u32 [#allocation3], 4
      %s41 = int_to_ptr.vmem [resolvable:$true] %s40
      %43 = dma.vmem_to_hbm [thread:$0]  %s41, 16, %s3, [#allocation4]
    $region17: #{tpu_custom_call.1} parent=1 // pred_fallthru
      _
    // Predicated region
    $region18: #{tpu_custom_call.1} parent=1 // pred_check
      _
    $region19: #{tpu_custom_call.1} parent=1 // pred_check_branch
      %45 = sbr.rel (0) target = $region21
    $region20: #{tpu_custom_call.1} parent=1 // pred_region
      %46 = dma.done [#allocation4], 16
    $region21: #{tpu_custom_call.1} parent=1 // pred_fallthru
      _
    %47 = vsyncpa [#allocation4], 1

</llo_original>
